<compile_context>
chip_gen: v7x
topology: tpu7x:2x2x1
jax: 0.10.0
libtpu: 0.0.40
codegen_flags: <defaults>
</compile_context>

<pallas_src>
import functools
import math

import jax
import jax.numpy as jnp
from jax.experimental import pallas as pl
from jax.experimental.pallas import tpu as pltpu

_VMEM_LIMIT = 32 * 1024 * 1024   # safe on v5e/v6e/v7x; actual usage is a few MiB


def _round_up(x, m):
    return (x + m - 1) // m * m


# -----------------------------------------------------------------------------
# Pallas GEMM with fused bias + activation epilogue (bf16 operands, fp32 acc)
# -----------------------------------------------------------------------------
def _choose_tiles(m, n):
    """Adaptive (TM, TN): big tiles for big M, >=2 grid cells when possible."""
    if m >= 512:
        tm = 512
    elif m >= 256:
        tm = 256
    else:
        tm = max(16, _round_up(m, 16))
    mp = _round_up(m, tm)
    tn = 256 if n >= 256 else 128
    np_ = _round_up(n, tn)
    # keep at least 2 parallel grid cells so both TensorCores get work on v7x
    if (mp // tm) * (np_ // tn) == 1 and tm >= 256:
        tm //= 2
    return tm, tn, mp, np_


def _make_matmul_kernel(act):
    def kernel(a_ref, b_ref, bias_ref, o_ref):
        res = jnp.dot(a_ref[...], b_ref[...],
                      preferred_element_type=jnp.float32)
        res = res + bias_ref[...]
        if act == "relu":
            res = jnp.maximum(res, 0.0)
        elif act == "sigmoid":
            res = 1.0 / (1.0 + jnp.exp(-res))
        elif act == "tanh":
            res = jnp.tanh(res)
        o_ref[...] = res.astype(o_ref.dtype)
    return kernel


@functools.lru_cache(maxsize=None)
def _get_matmul_fn(mp, k, np_, tm, tn, act):
    kernel = _make_matmul_kernel(act)
    flops = 2 * mp * np_ * k
    bytes_acc = mp * k * 2 + k * np_ * 2 + mp * np_ * 4 + np_ * 4
    return pl.pallas_call(
        kernel,
        out_shape=jax.ShapeDtypeStruct((mp, np_), jnp.float32),
        grid_spec=pltpu.PrefetchScalarGridSpec(
            num_scalar_prefetch=0,
            grid=(mp // tm, np_ // tn),
            in_specs=[
                pl.BlockSpec((tm, k), lambda i, j: (i, 0)),
                pl.BlockSpec((k, tn), lambda i, j: (0, j)),
                pl.BlockSpec((1, tn), lambda i, j: (0, j)),
            ],
            out_specs=pl.BlockSpec((tm, tn), lambda i, j: (i, j)),
        ),
        compiler_params=pltpu.CompilerParams(
            dimension_semantics=("parallel", "parallel"),
            vmem_limit_bytes=_VMEM_LIMIT),
        cost_estimate=pl.CostEstimate(flops=flops, transcendentals=0,
                                      bytes_accessed=bytes_acc),
    )


@functools.partial(jax.jit, static_argnames=("act",))
def matmul_bias_act(a, b, bias, *, act="none"):
    """(M,K)@(K,N)+bias[N] with optional fused relu/sigmoid/tanh epilogue."""
    m, k = a.shape
    _, n = b.shape
    tm, tn, mp, np_ = _choose_tiles(m, n)
    a = a.astype(jnp.bfloat16)
    b = b.astype(jnp.bfloat16)
    bias = bias.astype(jnp.float32)
    if mp != m:
        a = jnp.pad(a, ((0, mp - m), (0, 0)))
    if np_ != n:
        b = jnp.pad(b, ((0, 0), (0, np_ - n)))
        bias = jnp.pad(bias, (0, np_ - n))
    out = _get_matmul_fn(mp, k, np_, tm, tn, act)(a, b, bias.reshape(1, np_))
    if mp != m or np_ != n:
        out = out[:m, :n]
    return out


# -----------------------------------------------------------------------------
# Conv2d (NHWC activations, PyTorch (Cout,Cin,kh,kw) weights) via im2col + GEMM
# -----------------------------------------------------------------------------
# TODO(synk): kh*kw is still materialized as an im2col matrix in HBM instead of
# being folded into the GEMM reduction grid; it is emitted in bf16 to halve the
# amplified traffic.
@functools.partial(jax.jit, static_argnames=("stride", "padding", "act"))
def conv2d(x, w, b, *, stride=1, padding=0, act="none"):
    """x: (N,H,W,C) NHWC; w: (Cout,Cin,kh,kw); b: (Cout,). PyTorch semantics."""
    n, h, wd, c = x.shape
    cout, cin, kh, kw = w.shape
    sh, sw = (stride, stride) if isinstance(stride, int) else stride
    ph, pw = (padding, padding) if isinstance(padding, int) else padding
    oh = (h + 2 * ph - kh) // sh + 1
    ow = (wd + 2 * pw - kw) // sw + 1
    xb = x.astype(jnp.bfloat16)

    if (kh, kw) == (1, 1) and (sh, sw) == (1, 1) and (ph, pw) == (0, 0):
        cols = [xb]
    else:
        xp = jnp.pad(xb, ((0, 0), (ph, ph), (pw, pw), (0, 0)))
        cols = [xp[:, i:i + sh * oh:sh, j:j + sw * ow:sw, :]
                for i in range(kh) for j in range(kw)]

    k = kh * kw * c
    kp = _round_up(k, 128)
    if kp != k:  # fold K padding into the im2col concat (no extra pass)
        cols = cols + [jnp.zeros((n, oh, ow, kp - k), xb.dtype)]
    if len(cols) > 1:
        a = jnp.concatenate(cols, axis=-1).reshape(n * oh * ow, kp)
    else:
        a = cols[0].reshape(n * oh * ow, kp)

    bmat = jnp.transpose(w, (2, 3, 1, 0)).reshape(k, cout)
    if kp != k:
        bmat = jnp.pad(bmat, ((0, kp - k), (0, 0)))
    bmat = bmat.astype(jnp.bfloat16)

    out = matmul_bias_act(a, bmat, b, act=act)
    return out.reshape(n, oh, ow, cout)


def _conv(x, p, **kw):
    return conv2d(x, p["w"], p["b"], **kw)


def conv2d_fused(x, plist, *, stride=1, padding=0, act="none"):
    """Run sibling convs sharing the same input as one GEMM (Cout-concat)."""
    w = jnp.concatenate([q["w"] for q in plist], axis=0)
    b = jnp.concatenate([q["b"] for q in plist], axis=0)
    out = conv2d(x, w, b, stride=stride, padding=padding, act=act)
    splits, s = [], 0
    for q in plist[:-1]:
        s += q["w"].shape[0]
        splits.append(s)
    return jnp.split(out, splits, axis=-1)


# -----------------------------------------------------------------------------
# Norms (eval mode, NHWC)
# -----------------------------------------------------------------------------
def instance_norm(x, eps=1e-5):
    mean = x.mean(axis=(1, 2), keepdims=True)
    var = x.var(axis=(1, 2), keepdims=True)
    return (x - mean) * jax.lax.rsqrt(var + eps)


def batch_norm_eval(x, eps=1e-5):
    # NOTE: valid only for freshly-initialized synthetic BatchNorm2d in eval()
    # (running_mean=0, running_var=1, weight=1, bias=0)  ->  x / sqrt(1 + eps)
    return x * (1.0 / math.sqrt(1.0 + eps))


# -----------------------------------------------------------------------------
# Parameter initialization (deterministic, synthetic)
# -----------------------------------------------------------------------------
class ParamGen:
    def __init__(self, key):
        self._key = key

    def conv(self, cout, cin, kh, kw):
        self._key, k = jax.random.split(self._key)
        fan_in = cin * kh * kw
        w = jax.random.normal(k, (cout, cin, kh, kw), jnp.float32) / math.sqrt(fan_in)
        b = jnp.zeros((cout,), jnp.float32)
        return {"w": w, "b": b}


def init_encoder_params(pg, output_dim):
    def res(inp, planes, stride):
        d = {"conv1": pg.conv(planes, inp, 3, 3),
             "conv2": pg.conv(planes, planes, 3, 3)}
        if stride != 1:
            d["down"] = pg.conv(planes, inp, 1, 1)
        return d

    return {
        "conv1": pg.conv(64, 3, 7, 7),
        "layer1": [res(64, 64, 1), res(64, 64, 1)],
        "layer2": [res(64, 96, 2), res(96, 96, 1)],
        "layer3": [res(96, 128, 2), res(128, 128, 1)],
        "conv2": pg.conv(output_dim, 128, 1, 1),
    }


def init_update_params(pg):
    p = {
        "convc1": pg.conv(256, 324, 1, 1),
        "convc2": pg.conv(192, 256, 3, 3),
        "convf1": pg.conv(128, 2, 7, 7),
        "convf2": pg.conv(64, 128, 3, 3),
        "conv": pg.conv(126, 256, 3, 3),
        "fh_conv1": pg.conv(256, 128, 3, 3),
        "fh_conv2": pg.conv(2, 256, 3, 3),
        "mask_conv1": pg.conv(256, 128, 3, 3),
        "mask_conv2": pg.conv(576, 256, 1, 1),
    }
    for name in ("convz1", "convr1", "convq1"):
        p[name] = pg.conv(128, 384, 1, 5)
    for name in ("convz2", "convr2", "convq2"):
        p[name] = pg.conv(128, 384, 5, 1)
    return p


def init_raft_params(key):
    pg = ParamGen(key)
    return {
        "fnet": init_encoder_params(pg, 256),     # instance norm
        "cnet": init_encoder_params(pg, 256),     # batch norm (hdim+cdim)
        "update": init_update_params(pg),
    }


# -----------------------------------------------------------------------------
# BasicEncoder (NHWC)
# -----------------------------------------------------------------------------
def encoder_forward(p, x, norm_fn):
    norm = instance_norm if norm_fn == "instance" else batch_norm_eval

    def resblock(rp, x, stride):
        y = _conv(x, rp["conv1"], stride=stride, padding=1)
        y = jnp.maximum(norm(y), 0.0)
        y = _conv(y, rp["conv2"], stride=1, padding=1)
        y = jnp.maximum(norm(y), 0.0)
        if stride != 1:
            x = norm(_conv(x, rp["down"], stride=stride, padding=0))
        return jnp.maximum(x + y, 0.0)

    x = _conv(x, p["conv1"], stride=2, padding=3)
    x = jnp.maximum(norm(x), 0.0)
    x = resblock(p["layer1"][0], x, 1)
    x = resblock(p["layer1"][1], x, 1)
    x = resblock(p["layer2"][0], x, 2)
    x = resblock(p["layer2"][1], x, 1)
    x = resblock(p["layer3"][0], x, 2)
    x = resblock(p["layer3"][1], x, 1)
    return _conv(x, p["conv2"], stride=1, padding=0)


# -----------------------------------------------------------------------------
# Correlation block (batched Pallas GEMM + avg-pool pyramid)
# -----------------------------------------------------------------------------
@functools.lru_cache(maxsize=None)
def _get_corr_fn(nb, hwp, d, tile):
    def kernel(a_ref, b_ref, o_ref):
        o_ref[...] = jnp.dot(a_ref[0], b_ref[0],
                             preferred_element_type=jnp.float32)[None]

    return pl.pallas_call(
        kernel,
        out_shape=jax.ShapeDtypeStruct((nb, hwp, hwp), jnp.float32),
        grid_spec=pltpu.PrefetchScalarGridSpec(
            num_scalar_prefetch=0,
            grid=(nb, hwp // tile, hwp // tile),
            in_specs=[pl.BlockSpec((1, tile, d), lambda b, i, j: (b, i, 0)),
                      pl.BlockSpec((1, d, tile), lambda b, i, j: (b, 0, j))],
            out_specs=pl.BlockSpec((1, tile, tile), lambda b, i, j: (b, i, j)),
        ),
        compiler_params=pltpu.CompilerParams(
            dimension_semantics=("parallel", "parallel", "parallel"),
            vmem_limit_bytes=_VMEM_LIMIT),
        cost_estimate=pl.CostEstimate(
            flops=2 * nb * hwp * hwp * d, transcendentals=0,
            bytes_accessed=nb * (2 * hwp * d * 2 + hwp * hwp * 4)),
    )


def build_corr_pyramid(fmap1, fmap2, num_levels=4):
    n, h, w, d = fmap1.shape
    hw = h * w
    scale = 1.0 / math.sqrt(float(d))
    f1 = (fmap1.reshape(n, hw, d) * scale).astype(jnp.bfloat16)
    f2t = jnp.transpose(fmap2.reshape(n, hw, d), (0, 2, 1)).astype(jnp.bfloat16)
    hwp = _round_up(hw, 256)
    if hwp != hw:
        f1 = jnp.pad(f1, ((0, 0), (0, hwp - hw), (0, 0)))
        f2t = jnp.pad(f2t, ((0, 0), (0, 0), (0, hwp - hw)))
    tile = 256 if (hwp >= 512 or n >= 2) else 128
    corr = _get_corr_fn(n, hwp, d, tile)(f1, f2t)
    if hwp != hw:
        corr = corr[:, :hw, :hw]
    corr = corr.reshape(n * hw, h, w)

    pyramid = [corr]
    for _ in range(num_levels - 1):
        b, hh, ww = corr.shape
        corr = corr.reshape(b, hh // 2, 2, ww // 2, 2).mean(axis=(2, 4))
        pyramid.append(corr)
    return pyramid


# TODO(synk): grid_sample-style bilinear gather stays in JAX; a Pallas version
# would need a manual DMA gather which is out of scope here.
def bilinear_sample_zeros(img, coords):
    """img: (B,H,W) single-channel; coords: (B,Hg,Wg,2) with (...,0)=x, (...,1)=y.
    Matches F.grid_sample(align_corners=True, padding_mode='zeros')."""
    b, h, w = img.shape
    hg, wg = coords.shape[1], coords.shape[2]
    x = coords[..., 0]
    y = coords[..., 1]
    x0 = jnp.floor(x)
    y0 = jnp.floor(y)
    x1 = x0 + 1.0
    y1 = y0 + 1.0
    flat = img.reshape(b, h * w)

    def tap(yc, xc, wgt):
        valid = (xc >= 0) & (xc <= w - 1) & (yc >= 0) & (yc <= h - 1)
        xi = jnp.clip(xc, 0, w - 1).astype(jnp.int32)
        yi = jnp.clip(yc, 0, h - 1).astype(jnp.int32)
        idx = (yi * w + xi).reshape(b, hg * wg)
        vals = jnp.take_along_axis(flat, idx, axis=1).reshape(b, hg, wg)
        return vals * (wgt * valid.astype(jnp.float32))

    return (tap(y0, x0, (x1 - x) * (y1 - y)) +
            tap(y1, x0, (x1 - x) * (y - y0)) +
            tap(y0, x1, (x - x0) * (y1 - y)) +
            tap(y1, x1, (x - x0) * (y - y0)))


def corr_lookup(pyramid, coords, radius=4):
    """coords: (N,H,W,2) (x,y).  Returns (N,H,W,324) NHWC correlation features."""
    n, h, w, _ = coords.shape
    r = radius
    dx = jnp.linspace(-r, r, 2 * r + 1, dtype=jnp.float32)
    dy = jnp.linspace(-r, r, 2 * r + 1, dtype=jnp.float32)
    dyg, dxg = jnp.meshgrid(dy, dx, indexing="ij")
    # NOTE: (dy,dx) added to an (x,y) centroid replicates RAFT's own quirk;
    # works because dx and dy ranges are identical — do not change independently.
    delta = jnp.stack([dyg, dxg], axis=-1)
    out_pyr = []
    for lvl, corr in enumerate(pyramid):
        centroid = coords.reshape(n * h * w, 1, 1, 2) / (2.0 ** lvl)
        coords_lvl = centroid + delta[None]
        sampled = bilinear_sample_zeros(corr, coords_lvl)   # (NHW, 2r+1, 2r+1)
        out_pyr.append(sampled.reshape(n, h, w, -1))
    return jnp.concatenate(out_pyr, axis=-1)


# -----------------------------------------------------------------------------
# Update block (BasicMotionEncoder + SepConvGRU + FlowHead + mask head), NHWC
# -----------------------------------------------------------------------------
def update_block_forward(p, net, inp, corr, flow):
    cor = _conv(corr, p["convc1"], padding=0, act="relu")
    cor = _conv(cor, p["convc2"], padding=1, act="relu")
    flo = _conv(flow, p["convf1"], padding=3, act="relu")
    flo = _conv(flo, p["convf2"], padding=1, act="relu")
    out = _conv(jnp.concatenate([cor, flo], axis=-1), p["conv"],
                padding=1, act="relu")
    motion = jnp.concatenate([out, flow], axis=-1)          # 128 channels
    x = jnp.concatenate([inp, motion], axis=-1)             # 256 channels

    # SepConvGRU — horizontal pass (1x5); z & r fused, sigmoid in the epilogue
    hx = jnp.concatenate([net, x], axis=-1)
    z, r = conv2d_fused(hx, [p["convz1"], p["convr1"]],
                        padding=(0, 2), act="sigmoid")
    q = _conv(jnp.concatenate([r * net, x], axis=-1), p["convq1"],
              padding=(0, 2), act="tanh")
    net = (1.0 - z) * net + z * q
    # vertical pass (5x1)
    hx = jnp.concatenate([net, x], axis=-1)
    z, r = conv2d_fused(hx, [p["convz2"], p["convr2"]],
                        padding=(2, 0), act="sigmoid")
    q = _conv(jnp.concatenate([r * net, x], axis=-1), p["convq2"],
              padding=(2, 0), act="tanh")
    net = (1.0 - z) * net + z * q

    # flow-head conv1 + mask-head conv1 share `net`: fuse to Cout=512
    fh, m = conv2d_fused(net, [p["fh_conv1"], p["mask_conv1"]],
                         padding=1, act="relu")
    delta_flow = _conv(fh, p["fh_conv2"], padding=1)
    up_mask = 0.25 * _conv(m, p["mask_conv2"], padding=0)
    return net, up_mask, delta_flow


# -----------------------------------------------------------------------------
# RAFT forward (bidirectional, both directions batched together)
# -----------------------------------------------------------------------------
def coords_grid(batch, ht, wd):
    ys, xs = jnp.meshgrid(jnp.arange(ht), jnp.arange(wd), indexing="ij")
    coords = jnp.stack([xs, ys], axis=-1).astype(jnp.float32)   # (H,W,2) (x,y)
    return jnp.broadcast_to(coords[None], (batch, ht, wd, 2))


def upsample_flow(flow, mask):
    """flow: (N,H,W,2), mask: (N,H,W,576) -> (N,2,8H,8W) NCHW."""
    n, h, w, _ = flow.shape
    m = jax.nn.softmax(mask.reshape(n, h, w, 9, 8, 8), axis=3)
    fp = jnp.pad(8.0 * flow, ((0, 0), (1, 1), (1, 1), (0, 0)))
    taps = jnp.stack([fp[:, i:i + h, j:j + w, :]
                      for i in range(3) for j in range(3)], axis=3)  # (N,H,W,9,2)
    up = jnp.einsum("nhwkrc,nhwkf->nhrwcf", m, taps)                 # (N,H,8,W,8,2)
    up = up.reshape(n, 8 * h, 8 * w, 2)
    return jnp.transpose(up, (0, 3, 1, 2))


@functools.partial(jax.jit, static_argnames=("iters",))
def raft_forward_bidir(params, image1, image2, iters=12):
    """RAFT(image1->image2) and RAFT(image2->image1) fused into one batched
    pass.  Per-sample ops (convs, instance/batch norm) make this numerically
    identical to two independent calls, while halving fnet work and doubling
    the GEMM M dimension in the refinement loop."""
    hdim = cdim = 128
    n = image1.shape[0]
    # fnet on all distinct frames exactly once
    x = jnp.transpose(jnp.concatenate([image1, image2], axis=0), (0, 2, 3, 1))
    fmaps = encoder_forward(params["fnet"], x, "instance")
    f1, f2 = fmaps[:n], fmaps[n:]
    fmap1 = jnp.concatenate([f1, f2], axis=0)   # source features, both directions
    fmap2 = jnp.concatenate([f2, f1], axis=0)   # target features, both directions
    corr_pyr = build_corr_pyramid(fmap1, fmap2, num_levels=4)

    # context net on image1 of each direction == [image1; image2] == x
    cnet = encoder_forward(params["cnet"], x, "batch")
    net = jnp.tanh(cnet[..., :hdim])
    inp = jnp.maximum(cnet[..., hdim:hdim + cdim], 0.0)

    nb = 2 * n
    _, _, h, w = image1.shape
    coords0 = coords_grid(nb, h // 8, w // 8)
    coords1 = coords_grid(nb, h // 8, w // 8)

    up_mask = None
    for _ in range(iters):
        corr = corr_lookup(corr_pyr, coords1, radius=4)     # (2N,H/8,W/8,324)
        flow = coords1 - coords0
        net, up_mask, delta_flow = update_block_forward(
            params["update"], net, inp, corr, flow)
        coords1 = coords1 + delta_flow
    # only the final prediction is returned in test mode -> upsample once
    flow_up = upsample_flow(coords1 - coords0, up_mask)
    flow_final = jnp.transpose(coords1 - coords0, (0, 3, 1, 2))
    return flow_final, flow_up


def raft_runner_3d_forward(params, gt_local_frames, iters=20):
    b, l_t, c, h, w = gt_local_frames.shape
    gtlf_1 = gt_local_frames[:, :-1].reshape(-1, c, h, w)
    gtlf_2 = gt_local_frames[:, 1:].reshape(-1, c, h, w)
    n = gtlf_1.shape[0]
    _, flows_up = raft_forward_bidir(params, gtlf_1, gtlf_2, iters=iters)
    gt_flows_forward = flows_up[:n]
    gt_flows_backward = flows_up[n:]
    return (gt_flows_forward.reshape(b, l_t - 1, 2, h, w),
            gt_flows_backward.reshape(b, l_t - 1, 2, h, w))


# -----------------------------------------------------------------------------
if __name__ == "__main__":
    key = jax.random.PRNGKey(0)
    pkey, dkey = jax.random.split(key)
    params = init_raft_params(pkey)

    # Smallest spatial size keeping the 4-level correlation pyramid well-defined
    # (level-3 map must be > 1x1) is 128x128; iters kept small for runtime.
    b, l_t, c, h, w = 1, 2, 3, 128, 128
    gt_local_frames = jax.random.uniform(dkey, (b, l_t, c, h, w), jnp.float32)

    flows_fwd, flows_bwd = raft_runner_3d_forward(params, gt_local_frames, iters=2)
    jax.block_until_ready((flows_fwd, flows_bwd))

    assert flows_fwd.shape == (b, l_t - 1, 2, h, w)
    assert flows_bwd.shape == (b, l_t - 1, 2, h, w)
    assert bool(jnp.isfinite(flows_fwd).all()) and bool(jnp.isfinite(flows_bwd).all())
    print("KERNEL_OK")
</pallas_src>

<mosaic_0001>
module attributes {stable_mosaic.version = 11 : i64} {
  func.func @kernel(%arg0: i32, %arg1: i32, %arg2: memref<512x256xbf16, #tpu.memory_space<vmem>>, %arg3: memref<256x128xbf16, #tpu.memory_space<vmem>>, %arg4: memref<1x128xf32, #tpu.memory_space<vmem>>, %arg5: memref<512x128xf32, #tpu.memory_space<vmem>>) attributes {dimension_semantics = [#tpu.dimension_semantics<parallel>, #tpu.dimension_semantics<parallel>], iteration_bounds = array<i64: 16, 1>, scalar_prefetch = 0 : i64, scratch_operands = 0 : i64, tpu.core_type = #tpu.core_type<tc>, window_params = [{transform_indices = @transform_0, window_bounds = array<i64: 512, 256>}, {transform_indices = @transform_1, window_bounds = array<i64: 256, 128>}, {transform_indices = @transform_2, window_bounds = array<i64: 1, 128>}, {transform_indices = @transform_3, window_bounds = array<i64: 512, 128>}]} {
    %c0 = arith.constant 0 : index
    %c0_0 = arith.constant 0 : index
    %0 = vector.load %arg2[%c0, %c0_0] : memref<512x256xbf16, #tpu.memory_space<vmem>>, vector<512x256xbf16>
    %c0_1 = arith.constant 0 : index
    %c0_2 = arith.constant 0 : index
    %1 = vector.load %arg3[%c0_1, %c0_2] : memref<256x128xbf16, #tpu.memory_space<vmem>>, vector<256x128xbf16>
    %cst = arith.constant dense<0.000000e+00> : vector<512x128xf32>
    %2 = tpu.matmul %0, %1, %cst {dimension_numbers = #tpu.dot_dimension_numbers<[1], [0], [0], [1], [0, 0, 1, 1], [], []>} : vector<512x256xbf16>, vector<256x128xbf16>, vector<512x128xf32> -> vector<512x128xf32>
    %c0_3 = arith.constant 0 : index
    %c0_4 = arith.constant 0 : index
    %3 = vector.load %arg4[%c0_3, %c0_4] : memref<1x128xf32, #tpu.memory_space<vmem>>, vector<1x128xf32>
    %4 = vector.broadcast %3 : vector<1x128xf32> to vector<512x128xf32>
    %5 = arith.addf %2, %4 : vector<512x128xf32>
    %c0_5 = arith.constant 0 : index
    %c0_6 = arith.constant 0 : index
    %6 = vector.load %arg5[%c0_5, %c0_6] : memref<512x128xf32, #tpu.memory_space<vmem>>, vector<512x128xf32>
    tpu.vector_store %arg5[%c0_5, %c0_6], %5 {strides = array<i32>} : memref<512x128xf32, #tpu.memory_space<vmem>>, vector<512x128xf32>,
    return
  }
  func.func @transform_0(%arg0: i32, %arg1: i32) -> (i32, i32) {
    %c0_i32 = arith.constant 0 : i32
    %c0_i32_0 = arith.constant 0 : i32
    return %arg0, %c0_i32 : i32, i32
  }
  func.func @transform_1(%arg0: i32, %arg1: i32) -> (i32, i32) {
    %c0_i32 = arith.constant 0 : i32
    %c0_i32_0 = arith.constant 0 : i32
    return %c0_i32, %arg1 : i32, i32
  }
  func.func @transform_2(%arg0: i32, %arg1: i32) -> (i32, i32) {
    %c0_i32 = arith.constant 0 : i32
    %c0_i32_0 = arith.constant 0 : i32
    return %c0_i32, %arg1 : i32, i32
  }
  func.func @transform_3(%arg0: i32, %arg1: i32) -> (i32, i32) {
    %c0_i32 = arith.constant 0 : i32
    return %arg0, %arg1 : i32, i32
  }
}

</mosaic_0001>

<llo_original>
// kernel: matmul_bias_act.1
$region0: #{matmul_bias_act.1}
  #allocation0 [shape = 'u32[]', space=smem, size = 0x4, offset = 0x4, fixed_abs, tag = 'smem constant byte address 0x4 - core index']
  #allocation1 [shape = 'u32[144,128]{1,0:T(1,128)}', space=vmem, size = 0x12000, scoped, tag = 'internal scratch']
  %s0 = inlined_call_operand.hbm [shape: bf16[8192,256], index: 0, kind: input, shape index: {}]
  %s1 = inlined_call_operand.vmem [shape: bf16[256,128], index: 1, kind: input, shape index: {}]
  %s2 = inlined_call_operand.vmem [shape: f32[1,128], index: 2, kind: input, shape index: {}]
  %s3 = inlined_call_operand.vmem [shape: f32[8192,128], index: 3, kind: output, shape index: {}]
  %s4 = sld [smem:[#allocation0]]
  $region49: #{matmul_bias_act.1} parent=0
    _
  %s6 = ssub.s32 1, %s4
  %s7 = scalar_select 0, %s6, %s4
  $region1: #{matmul_bias_act.1} parent=0
    #allocation2 [shape = 'u8[524288]{0}', space=vmem, size = 0x80000, scoped, tag = 'input window, operand 0']
    #allocation3 [shape = 's32[2]{0}', space=sflag, size = 0x8, scoped, tag = 'scoped memory for matmul_bias_act.1']
    %8 = vsyncpa [#allocation3], 0
    %s9 = scalar_lea.sflag [#allocation3], 1
    %10 = vsyncpa %s9, 0
    loop: start=0, step=1, limit=18
    $region2: #{matmul_bias_act.1} parent=1 // loop_pre_header
      _
    $region3: #{matmul_bias_act.1} parent=1 // loop_header
      %s12 = sphi 0, %s16
      %p13 = scmp.ge.s32.totalorder %s12, 18
      %s19 = sphi 0, %s31
      %s20 = sphi 0, %s27
      %s21 = sphi 0, %s19
      %s22 = sphi 0, %s20
      %s23 = sphi 0, %s21
      %s24 = sphi 0, %s22
      %s34 = sphi 0, %s36
      %s37 = sphi 0, %s34
      %s38 = sphi 0, %s37
      %s54 = sphi 0, %s38
      %s60 = sphi 0, %s62
      %s63 = sphi 0, %s60
      %s64 = sphi 0, %s63
      %s80 = sphi 0, %s64
      %s86 = sphi 0, %s88
      %s89 = sphi 0, %s86
      %s90 = sphi 0, %s89
      %s106 = sphi 0, %s90
      %s114 = sphi 0, %s116
      %s117 = sphi 0, %s114
      %s118 = sphi 0, %s117
      %s134 = sphi 0, %s118
    $region4: #{matmul_bias_act.1} parent=1 // loop_header_branch
      %15 = sbr.rel (%p13) target = $region8
    $region5: #{matmul_bias_act.1} parent=1 // loop_body
      %s17 = ssub.s32 %s12, 1
      %s18 = ssub.s32 %s12, 2
      %s25 = sadd.s32 1, %s20
      %p26 = scmp.ge.s32.totalorder %s25, 1
      %s27 = scalar_select %p26, 0, %s25
      %s28 = sadd.s32 1, %s19
      %s29 = scalar_select %p26, %s28, %s19
      %p30 = scmp.ge.s32.totalorder %s29, 16
      %s31 = scalar_select %p30, 0, %s29
      %s32 = ssub.s32 %s19, %s31
      %p33 = scmp.eq.s32.totalorder %s32, 0
      %s35 = sadd.s32 %s34, 1
      %s36 = scalar_select %p33, %s34, %s35
      %p39 = pneg %p33
      %p40 = scmp.eq.s32.totalorder %s12, 15
      %p41 = por %p39, %p40
      %p42 = scmp.ne.s32.totalorder %s34, %s37
      %p43 = scmp.eq.s32.totalorder %s12, 0
      %p44 = por %p42, %p43
      %p45 = scmp.ne.s32.totalorder %s34, %s37
      %p46 = scmp.eq.s32.totalorder %s17, 15
      %p47 = por %p45, %p46
      %p48 = scmp.ne.s32.totalorder %s37, %s38
      %p49 = scmp.eq.s32.totalorder %s17, 0
      %p50 = por %p48, %p49
      %p51 = scmp.ne.s32.totalorder %s37, %s38
      %p52 = scmp.eq.s32.totalorder %s18, 15
      %p53 = por %p51, %p52
      %p55 = scmp.ne.s32.totalorder %s38, %s54
      %p56 = scmp.eq.s32.totalorder %s18, 0
      %p57 = por %p55, %p56
      %s58 = ssub.s32 %s20, %s27
      %p59 = scmp.eq.s32.totalorder %s58, 0
      %s61 = sadd.s32 %s60, 1
      %s62 = scalar_select %p59, %s60, %s61
      %p65 = pneg %p59
      %p66 = scmp.eq.s32.totalorder %s12, 15
      %p67 = por %p65, %p66
      %p68 = scmp.ne.s32.totalorder %s60, %s63
      %p69 = scmp.eq.s32.totalorder %s12, 0
      %p70 = por %p68, %p69
      %p71 = scmp.ne.s32.totalorder %s60, %s63
      %p72 = scmp.eq.s32.totalorder %s17, 15
      %p73 = por %p71, %p72
      %p74 = scmp.ne.s32.totalorder %s63, %s64
      %p75 = scmp.eq.s32.totalorder %s17, 0
      %p76 = por %p74, %p75
      %p77 = scmp.ne.s32.totalorder %s63, %s64
      %p78 = scmp.eq.s32.totalorder %s18, 15
      %p79 = por %p77, %p78
      %p81 = scmp.ne.s32.totalorder %s64, %s80
      %p82 = scmp.eq.s32.totalorder %s18, 0
      %p83 = por %p81, %p82
      %s84 = ssub.s32 %s20, %s27
      %p85 = scmp.eq.s32.totalorder %s84, 0
      %s87 = sadd.s32 %s86, 1
      %s88 = scalar_select %p85, %s86, %s87
      %p91 = pneg %p85
      %p92 = scmp.eq.s32.totalorder %s12, 15
      %p93 = por %p91, %p92
      %p94 = scmp.ne.s32.totalorder %s86, %s89
      %p95 = scmp.eq.s32.totalorder %s12, 0
      %p96 = por %p94, %p95
      %p97 = scmp.ne.s32.totalorder %s86, %s89
      %p98 = scmp.eq.s32.totalorder %s17, 15
      %p99 = por %p97, %p98
      %p100 = scmp.ne.s32.totalorder %s89, %s90
      %p101 = scmp.eq.s32.totalorder %s17, 0
      %p102 = por %p100, %p101
      %p103 = scmp.ne.s32.totalorder %s89, %s90
      %p104 = scmp.eq.s32.totalorder %s18, 15
      %p105 = por %p103, %p104
      %p107 = scmp.ne.s32.totalorder %s90, %s106
      %p108 = scmp.eq.s32.totalorder %s18, 0
      %p109 = por %p107, %p108
      %s110 = ssub.s32 %s19, %s31
      %s111 = ssub.s32 %s20, %s27
      %s112 = sor.u32 %s110, %s111
      %p113 = scmp.eq.s32.totalorder %s112, 0
      %s115 = sadd.s32 %s114, 1
      %s116 = scalar_select %p113, %s114, %s115
      %p119 = pneg %p113
      %p120 = scmp.eq.s32.totalorder %s12, 15
      %p121 = por %p119, %p120
      %p122 = scmp.ne.s32.totalorder %s114, %s117
      %p123 = scmp.eq.s32.totalorder %s12, 0
      %p124 = por %p122, %p123
      %p125 = scmp.ne.s32.totalorder %s114, %s117
      %p126 = scmp.eq.s32.totalorder %s17, 15
      %p127 = por %p125, %p126
      %p128 = scmp.ne.s32.totalorder %s117, %s118
      %p129 = scmp.eq.s32.totalorder %s17, 0
      %p130 = por %p128, %p129
      %p131 = scmp.ne.s32.totalorder %s117, %s118
      %p132 = scmp.eq.s32.totalorder %s18, 15
      %p133 = por %p131, %p132
      %p135 = scmp.ne.s32.totalorder %s118, %s134
      %p136 = scmp.eq.s32.totalorder %s18, 0
      %p137 = por %p135, %p136
      %p138 = scmp.le.s32.totalorder 1, %s12
      %p139 = scmp.lt.s32.totalorder %s12, 17
      %p140 = pnand %p138, %p139
      %p141 = pneg %p140
      // Predicated region
      $region9: #{matmul_bias_act.1} parent=5 // pred_check
        _
      $region10: #{matmul_bias_act.1} parent=5 // pred_check_branch
        %143 = sbr.rel (%p140) target = $region12
      $region11: #{matmul_bias_act.1} parent=5 // pred_region
        %s144 = ssub.s32 %s12, 1
        // Predicated region
        $region13: #{matmul_bias_act.1} parent=11 // pred_check
          %p145 = pneg %p76
        $region14: #{matmul_bias_act.1} parent=11 // pred_check_branch
          %147 = sbr.rel (%p145) target = $region16
        $region15: #{matmul_bias_act.1} parent=11 // pred_region
          %p148 = scmp.lt.s32.totalorder %s22, 0
          %s149 = scalar_select %p148, %s22, 0
          %s150 = smul.addr %s149, 4
          %s151 = scalar_lea.vmem %s1, %s150
        $region16: #{matmul_bias_act.1} parent=11 // pred_fallthru
          _
        // Predicated region
        $region17: #{matmul_bias_act.1} parent=11 // pred_check
          %p152 = pneg %p102
        $region18: #{matmul_bias_act.1} parent=11 // pred_check_branch
          %154 = sbr.rel (%p152) target = $region20
        $region19: #{matmul_bias_act.1} parent=11 // pred_region
          %p155 = scmp.lt.s32.totalorder %s22, 0
          %s156 = scalar_select %p155, %s22, 0
          %s157 = scalar_lea.vmem %s2, %s156
        $region20: #{matmul_bias_act.1} parent=11 // pred_fallthru
          _
      $region12: #{matmul_bias_act.1} parent=5 // pred_fallthru
        _
      %p158 = scmp.lt.s32.totalorder %s12, 16
      // Predicated region
      $region21: #{matmul_bias_act.1} parent=5 // pred_check
        %p159 = pneg %p158
      $region22: #{matmul_bias_act.1} parent=5 // pred_check_branch
        %161 = sbr.rel (%p159) target = $region24
      $region23: #{matmul_bias_act.1} parent=5 // pred_region
        // Predicated region
        $region25: #{matmul_bias_act.1} parent=23 // pred_check
          %p162 = pneg %p44
        $region26: #{matmul_bias_act.1} parent=23 // pred_check_branch
          %164 = sbr.rel (%p162) target = $region28
        $region27: #{matmul_bias_act.1} parent=23 // pred_region
          %s165 = sand.u32 %s34, 1
          %s166 = scalar_lea.sflag [#allocation3], %s165
          %s167 = sand.u32 %s34, 1
          %s168 = smul.addr %s167, 512
          %s169 = scalar_lea.vmem [#allocation2], %s168
          %s170 = smul.u32 64, %s19
          %s172 = ssub.s32 8192, 8192
          %173 = vsyncadd %s166, %s172
          %s174 = smul.addr %s170, 2
          %s175 = smul.addr %s174, 64
          %s176 = scalar_lea.hbm %s0, %s175
          %s177 = sshll.u32 %s169, 4
          %s178 = int_to_ptr.vmem [resolvable:$true] %s177
          %183 = dma.hbm_to_vmem [thread:$0]  %s176, 8192, %s178, %s166, 128, 128, 8
        $region28: #{matmul_bias_act.1} parent=23 // pred_fallthru
          _
      $region24: #{matmul_bias_act.1} parent=5 // pred_fallthru
        _
      %p184 = scmp.le.s32.totalorder 1, %s12
      %p185 = scmp.lt.s32.totalorder %s12, 17
      %p186 = pnand %p184, %p185
      %p187 = pneg %p186
      // Predicated region
      $region29: #{matmul_bias_act.1} parent=5 // pred_check
        _
      $region30: #{matmul_bias_act.1} parent=5 // pred_check_branch
        %189 = sbr.rel (%p186) target = $region32
      $region31: #{matmul_bias_act.1} parent=5 // pred_region
        %s190 = ssub.s32 %s12, 1
        %s191 = sand.u32 %s37, 1
        %s192 = scalar_lea.sflag [#allocation3], %s191
        %s193 = sand.u32 %s37, 1
        %s194 = smul.addr %s193, 512
        %s195 = scalar_lea.vmem [#allocation2], %s194
        // Predicated region
        $region33: #{matmul_bias_act.1} parent=31 // pred_check
          %p196 = pneg %p50
        $region34: #{matmul_bias_act.1} parent=31 // pred_check_branch
          %198 = sbr.rel (%p196) target = $region36
        $region35: #{matmul_bias_act.1} parent=31 // pred_region
          %199 = dma.done %s192, 8192
        $region36: #{matmul_bias_act.1} parent=31 // pred_fallthru
          _
        %s200 = sand.u32 %s37, 1
        %s201 = scalar_lea.sflag [#allocation3], %s200
        %s202 = sand.u32 %s37, 1
        %s203 = smul.addr %s202, 512
        %s204 = scalar_lea.vmem [#allocation2], %s203
        %p205 = pneg %p50
        %p206 = pneg %p47
        %p207 = scmp.lt.s32.totalorder %s22, 0
        %s208 = scalar_select %p207, %s22, 0
        %s209 = smul.addr %s208, 4
        %s210 = scalar_lea.vmem %s1, %s209
        %p211 = pneg %p76
        %p212 = pneg %p73
        %p213 = scmp.lt.s32.totalorder %s22, 0
        %s214 = scalar_select %p213, %s22, 0
        %s215 = scalar_lea.vmem %s2, %s214
        %p216 = pneg %p102
        %p217 = pneg %p99
        %p218 = pneg %p130
        %p219 = pneg %p127
        %s220 = smul.u32 64, %s21
        %p221 = scmp.lt.s32.totalorder %s220, 1023
        %s222 = scalar_select %p221, %s220, 1023
        %p223 = scmp.lt.s32.totalorder %s22, 0
        %s224 = scalar_select %p223, %s22, 0
        %s225 = sadd.s32 %s224, %s222
        %s226 = smul.addr %s225, 8
        %s227 = scalar_lea.vmem %s3, %s226
        %s228 = smul.u32 64, %s21
        %p229 = scmp.lt.s32.totalorder %s22, 0
        %s230 = scalar_select %p229, %s22, 0
        %s231 = smul.addr %s230, 4
        %s232 = scalar_lea.vmem %s1, %s231
        %p233 = scmp.lt.s32.totalorder %s22, 0
        %s234 = scalar_select %p233, %s22, 0
        %s235 = scalar_lea.vmem %s2, %s234
        %s236 = smul.u32 64, %s21
        %p237 = scmp.lt.s32.totalorder %s236, 1023
        %s238 = scalar_select %p237, %s236, 1023
        %p239 = scmp.lt.s32.totalorder %s22, 0
        %s240 = scalar_select %p239, %s22, 0
        %s241 = sadd.s32 %s240, %s238
        %s242 = smul.addr %s241, 8
        %s243 = scalar_lea.vmem %s3, %s242
        %s244 = smul.u32 64, %s21
        %v246 = vld [vmem:[%s195] sm:$0xff]
        %v247 = vld [vmem:[%s195 + $0x8] sm:$0xff]
        %v248 = vld [vmem:[%s195 + $0x10] sm:$0xff]
        %v249 = vld [vmem:[%s195 + $0x18] sm:$0xff]
        %v250 = vld [vmem:[%s195 + $0x20] sm:$0xff]
        %v251 = vld [vmem:[%s195 + $0x28] sm:$0xff]
        %v252 = vld [vmem:[%s195 + $0x30] sm:$0xff]
        %v253 = vld [vmem:[%s195 + $0x38] sm:$0xff]
        %v254 = vld [vmem:[%s195 + $0x40] sm:$0xff]
        %v255 = vld [vmem:[%s195 + $0x48] sm:$0xff]
        %v256 = vld [vmem:[%s195 + $0x50] sm:$0xff]
        %v257 = vld [vmem:[%s195 + $0x58] sm:$0xff]
        %v258 = vld [vmem:[%s195 + $0x60] sm:$0xff]
        %v259 = vld [vmem:[%s195 + $0x68] sm:$0xff]
        %v260 = vld [vmem:[%s195 + $0x70] sm:$0xff]
        %v261 = vld [vmem:[%s195 + $0x78] sm:$0xff]
        %v262 = vld [vmem:[%s195 + $0x80] sm:$0xff]
        %v263 = vld [vmem:[%s195 + $0x88] sm:$0xff]
        %v264 = vld [vmem:[%s195 + $0x90] sm:$0xff]
        %v265 = vld [vmem:[%s195 + $0x98] sm:$0xff]
        %v266 = vld [vmem:[%s195 + $0xa0] sm:$0xff]
        %v267 = vld [vmem:[%s195 + $0xa8] sm:$0xff]
        %v268 = vld [vmem:[%s195 + $0xb0] sm:$0xff]
        %v269 = vld [vmem:[%s195 + $0xb8] sm:$0xff]
        %v270 = vld [vmem:[%s195 + $0xc0] sm:$0xff]
        %v271 = vld [vmem:[%s195 + $0xc8] sm:$0xff]
        %v272 = vld [vmem:[%s195 + $0xd0] sm:$0xff]
        %v273 = vld [vmem:[%s195 + $0xd8] sm:$0xff]
        %v274 = vld [vmem:[%s195 + $0xe0] sm:$0xff]
        %v275 = vld [vmem:[%s195 + $0xe8] sm:$0xff]
        %v276 = vld [vmem:[%s195 + $0xf0] sm:$0xff]
        %v277 = vld [vmem:[%s195 + $0xf8] sm:$0xff]
        %v278 = vld [vmem:[%s195 + $0x100] sm:$0xff]
        %v279 = vld [vmem:[%s195 + $0x108] sm:$0xff]
        %v280 = vld [vmem:[%s195 + $0x110] sm:$0xff]
        %v281 = vld [vmem:[%s195 + $0x118] sm:$0xff]
        %v282 = vld [vmem:[%s195 + $0x120] sm:$0xff]
        %v283 = vld [vmem:[%s195 + $0x128] sm:$0xff]
        %v284 = vld [vmem:[%s195 + $0x130] sm:$0xff]
        %v285 = vld [vmem:[%s195 + $0x138] sm:$0xff]
        %v286 = vld [vmem:[%s195 + $0x140] sm:$0xff]
        %v287 = vld [vmem:[%s195 + $0x148] sm:$0xff]
        %v288 = vld [vmem:[%s195 + $0x150] sm:$0xff]
        %v289 = vld [vmem:[%s195 + $0x158] sm:$0xff]
        %v290 = vld [vmem:[%s195 + $0x160] sm:$0xff]
        %v291 = vld [vmem:[%s195 + $0x168] sm:$0xff]
        %v292 = vld [vmem:[%s195 + $0x170] sm:$0xff]
        %v293 = vld [vmem:[%s195 + $0x178] sm:$0xff]
        %v294 = vld [vmem:[%s195 + $0x180] sm:$0xff]
        %v295 = vld [vmem:[%s195 + $0x188] sm:$0xff]
        %v296 = vld [vmem:[%s195 + $0x190] sm:$0xff]
        %v297 = vld [vmem:[%s195 + $0x198] sm:$0xff]
        %v298 = vld [vmem:[%s195 + $0x1a0] sm:$0xff]
        %v299 = vld [vmem:[%s195 + $0x1a8] sm:$0xff]
        %v300 = vld [vmem:[%s195 + $0x1b0] sm:$0xff]
        %v301 = vld [vmem:[%s195 + $0x1b8] sm:$0xff]
        %v302 = vld [vmem:[%s195 + $0x1c0] sm:$0xff]
        %v303 = vld [vmem:[%s195 + $0x1c8] sm:$0xff]
        %v304 = vld [vmem:[%s195 + $0x1d0] sm:$0xff]
        %v305 = vld [vmem:[%s195 + $0x1d8] sm:$0xff]
        %v306 = vld [vmem:[%s195 + $0x1e0] sm:$0xff]
        %v307 = vld [vmem:[%s195 + $0x1e8] sm:$0xff]
        %v308 = vld [vmem:[%s195 + $0x1f0] sm:$0xff]
        %v309 = vld [vmem:[%s195 + $0x1f8] sm:$0xff]
        %v310 = vld [vmem:[%s232] sm:$0xf]
        %v311 = vld [vmem:[%s232 + $0x4] sm:$0xf]
        %v312 = vld [vmem:[%s232 + $0x8] sm:$0xf]
        %v313 = vld [vmem:[%s232 + $0xc] sm:$0xf]
        %v314 = vld [vmem:[%s232 + $0x10] sm:$0xf]
        %v315 = vld [vmem:[%s232 + $0x14] sm:$0xf]
        %v316 = vld [vmem:[%s232 + $0x18] sm:$0xf]
        %v317 = vld [vmem:[%s232 + $0x1c] sm:$0xf]
        %v318 = vld [vmem:[%s232 + $0x20] sm:$0xf]
        %v319 = vld [vmem:[%s232 + $0x24] sm:$0xf]
        %v320 = vld [vmem:[%s232 + $0x28] sm:$0xf]
        %v321 = vld [vmem:[%s232 + $0x2c] sm:$0xf]
        %v322 = vld [vmem:[%s232 + $0x30] sm:$0xf]
        %v323 = vld [vmem:[%s232 + $0x34] sm:$0xf]
        %v324 = vld [vmem:[%s232 + $0x38] sm:$0xf]
        %v325 = vld [vmem:[%s232 + $0x3c] sm:$0xf]
        %v326 = vld [vmem:[%s232 + $0x40] sm:$0xf]
        %v327 = vld [vmem:[%s232 + $0x44] sm:$0xf]
        %v328 = vld [vmem:[%s232 + $0x48] sm:$0xf]
        %v329 = vld [vmem:[%s232 + $0x4c] sm:$0xf]
        %v330 = vld [vmem:[%s232 + $0x50] sm:$0xf]
        %v331 = vld [vmem:[%s232 + $0x54] sm:$0xf]
        %v332 = vld [vmem:[%s232 + $0x58] sm:$0xf]
        %v333 = vld [vmem:[%s232 + $0x5c] sm:$0xf]
        %v334 = vld [vmem:[%s232 + $0x60] sm:$0xf]
        %v335 = vld [vmem:[%s232 + $0x64] sm:$0xf]
        %v336 = vld [vmem:[%s232 + $0x68] sm:$0xf]
        %v337 = vld [vmem:[%s232 + $0x6c] sm:$0xf]
        %v338 = vld [vmem:[%s232 + $0x70] sm:$0xf]
        %v339 = vld [vmem:[%s232 + $0x74] sm:$0xf]
        %v340 = vld [vmem:[%s232 + $0x78] sm:$0xf]
        %v341 = vld [vmem:[%s232 + $0x7c] sm:$0xf]
        %v342 = vld [vmem:[%s235] sm:$0x1]
        %v344 = vlaneseq
        %v345 = vshrl.u32 %v344, 7
        %v346 = vsub.s32 0, %v345
        %v347 = vrot.slane %v342, %v346
        %v413 = vunpack.c.l.b16 %v246
        %v414 = vunpack.c.h.b16 %v246
        %v415 = vunpack.c.l.b16 %v247
        %v416 = vunpack.c.h.b16 %v247
        %v417 = vunpack.c.l.b16 %v248
        %v418 = vunpack.c.h.b16 %v248
        %v419 = vunpack.c.l.b16 %v249
        %v420 = vunpack.c.h.b16 %v249
        %v421 = vunpack.c.l.b16 %v250
        %v422 = vunpack.c.h.b16 %v250
        %v423 = vunpack.c.l.b16 %v251
        %v424 = vunpack.c.h.b16 %v251
        %v425 = vunpack.c.l.b16 %v252
        %v426 = vunpack.c.h.b16 %v252
        %v427 = vunpack.c.l.b16 %v253
        %v428 = vunpack.c.h.b16 %v253
        %v429 = vunpack.c.l.b16 %v254
        %v430 = vunpack.c.h.b16 %v254
        %v431 = vunpack.c.l.b16 %v255
        %v432 = vunpack.c.h.b16 %v255
        %v433 = vunpack.c.l.b16 %v256
        %v434 = vunpack.c.h.b16 %v256
        %v435 = vunpack.c.l.b16 %v257
        %v436 = vunpack.c.h.b16 %v257
        %v437 = vunpack.c.l.b16 %v258
        %v438 = vunpack.c.h.b16 %v258
        %v439 = vunpack.c.l.b16 %v259
        %v440 = vunpack.c.h.b16 %v259
        %v441 = vunpack.c.l.b16 %v260
        %v442 = vunpack.c.h.b16 %v260
        %v443 = vunpack.c.l.b16 %v261
        %v444 = vunpack.c.h.b16 %v261
        %v445 = vunpack.c.l.b16 %v262
        %v446 = vunpack.c.h.b16 %v262
        %v447 = vunpack.c.l.b16 %v263
        %v448 = vunpack.c.h.b16 %v263
        %v449 = vunpack.c.l.b16 %v264
        %v450 = vunpack.c.h.b16 %v264
        %v451 = vunpack.c.l.b16 %v265
        %v452 = vunpack.c.h.b16 %v265
        %v453 = vunpack.c.l.b16 %v266
        %v454 = vunpack.c.h.b16 %v266
        %v455 = vunpack.c.l.b16 %v267
        %v456 = vunpack.c.h.b16 %v267
        %v457 = vunpack.c.l.b16 %v268
        %v458 = vunpack.c.h.b16 %v268
        %v459 = vunpack.c.l.b16 %v269
        %v460 = vunpack.c.h.b16 %v269
        %v461 = vunpack.c.l.b16 %v270
        %v462 = vunpack.c.h.b16 %v270
        %v463 = vunpack.c.l.b16 %v271
        %v464 = vunpack.c.h.b16 %v271
        %v465 = vunpack.c.l.b16 %v272
        %v466 = vunpack.c.h.b16 %v272
        %v467 = vunpack.c.l.b16 %v273
        %v468 = vunpack.c.h.b16 %v273
        %v469 = vunpack.c.l.b16 %v274
        %v470 = vunpack.c.h.b16 %v274
        %v471 = vunpack.c.l.b16 %v275
        %v472 = vunpack.c.h.b16 %v275
        %v473 = vunpack.c.l.b16 %v276
        %v474 = vunpack.c.h.b16 %v276
        %v475 = vunpack.c.l.b16 %v277
        %v476 = vunpack.c.h.b16 %v277
        %v477 = vunpack.c.l.b16 %v278
        %v478 = vunpack.c.h.b16 %v278
        %v479 = vunpack.c.l.b16 %v279
        %v480 = vunpack.c.h.b16 %v279
        %v481 = vunpack.c.l.b16 %v280
        %v482 = vunpack.c.h.b16 %v280
        %v483 = vunpack.c.l.b16 %v281
        %v484 = vunpack.c.h.b16 %v281
        %v485 = vunpack.c.l.b16 %v282
        %v486 = vunpack.c.h.b16 %v282
        %v487 = vunpack.c.l.b16 %v283
        %v488 = vunpack.c.h.b16 %v283
        %v489 = vunpack.c.l.b16 %v284
        %v490 = vunpack.c.h.b16 %v284
        %v491 = vunpack.c.l.b16 %v285
        %v492 = vunpack.c.h.b16 %v285
        %v493 = vunpack.c.l.b16 %v286
        %v494 = vunpack.c.h.b16 %v286
        %v495 = vunpack.c.l.b16 %v287
        %v496 = vunpack.c.h.b16 %v287
        %v497 = vunpack.c.l.b16 %v288
        %v498 = vunpack.c.h.b16 %v288
        %v499 = vunpack.c.l.b16 %v289
        %v500 = vunpack.c.h.b16 %v289
        %v501 = vunpack.c.l.b16 %v290
        %v502 = vunpack.c.h.b16 %v290
        %v503 = vunpack.c.l.b16 %v291
        %v504 = vunpack.c.h.b16 %v291
        %v505 = vunpack.c.l.b16 %v292
        %v506 = vunpack.c.h.b16 %v292
        %v507 = vunpack.c.l.b16 %v293
        %v508 = vunpack.c.h.b16 %v293
        %v509 = vunpack.c.l.b16 %v294
        %v510 = vunpack.c.h.b16 %v294
        %v511 = vunpack.c.l.b16 %v295
        %v512 = vunpack.c.h.b16 %v295
        %v513 = vunpack.c.l.b16 %v296
        %v514 = vunpack.c.h.b16 %v296
        %v515 = vunpack.c.l.b16 %v297
        %v516 = vunpack.c.h.b16 %v297
        %v517 = vunpack.c.l.b16 %v298
        %v518 = vunpack.c.h.b16 %v298
        %v519 = vunpack.c.l.b16 %v299
        %v520 = vunpack.c.h.b16 %v299
        %v521 = vunpack.c.l.b16 %v300
        %v522 = vunpack.c.h.b16 %v300
        %v523 = vunpack.c.l.b16 %v301
        %v524 = vunpack.c.h.b16 %v301
        %v525 = vunpack.c.l.b16 %v302
        %v526 = vunpack.c.h.b16 %v302
        %v527 = vunpack.c.l.b16 %v303
        %v528 = vunpack.c.h.b16 %v303
        %v529 = vunpack.c.l.b16 %v304
        %v530 = vunpack.c.h.b16 %v304
        %v531 = vunpack.c.l.b16 %v305
        %v532 = vunpack.c.h.b16 %v305
        %v533 = vunpack.c.l.b16 %v306
        %v534 = vunpack.c.h.b16 %v306
        %v535 = vunpack.c.l.b16 %v307
        %v536 = vunpack.c.h.b16 %v307
        %v537 = vunpack.c.l.b16 %v308
        %v538 = vunpack.c.h.b16 %v308
        %v539 = vunpack.c.l.b16 %v309
        %v540 = vunpack.c.h.b16 %v309
        %v541 = vpack.c.b16 %v415, %v413
        %v542 = vpack.c.b16 %v416, %v414
        %v543 = vpack.c.b16 %v419, %v417
        %v544 = vpack.c.b16 %v420, %v418
        %v545 = vpack.c.b16 %v423, %v421
        %v546 = vpack.c.b16 %v424, %v422
        %v547 = vpack.c.b16 %v427, %v425
        %v548 = vpack.c.b16 %v428, %v426
        %v549 = vpack.c.b16 %v431, %v429
        %v550 = vpack.c.b16 %v432, %v430
        %v551 = vpack.c.b16 %v435, %v433
        %v552 = vpack.c.b16 %v436, %v434
        %v553 = vpack.c.b16 %v439, %v437
        %v554 = vpack.c.b16 %v440, %v438
        %v555 = vpack.c.b16 %v443, %v441
        %v556 = vpack.c.b16 %v444, %v442
        %v557 = vpack.c.b16 %v447, %v445
        %v558 = vpack.c.b16 %v448, %v446
        %v559 = vpack.c.b16 %v451, %v449
        %v560 = vpack.c.b16 %v452, %v450
        %v561 = vpack.c.b16 %v455, %v453
        %v562 = vpack.c.b16 %v456, %v454
        %v563 = vpack.c.b16 %v459, %v457
        %v564 = vpack.c.b16 %v460, %v458
        %v565 = vpack.c.b16 %v463, %v461
        %v566 = vpack.c.b16 %v464, %v462
        %v567 = vpack.c.b16 %v467, %v465
        %v568 = vpack.c.b16 %v468, %v466
        %v569 = vpack.c.b16 %v471, %v469
        %v570 = vpack.c.b16 %v472, %v470
        %v571 = vpack.c.b16 %v475, %v473
        %v572 = vpack.c.b16 %v476, %v474
        %v573 = vpack.c.b16 %v479, %v477
        %v574 = vpack.c.b16 %v480, %v478
        %v575 = vpack.c.b16 %v483, %v481
        %v576 = vpack.c.b16 %v484, %v482
        %v577 = vpack.c.b16 %v487, %v485
        %v578 = vpack.c.b16 %v488, %v486
        %v579 = vpack.c.b16 %v491, %v489
        %v580 = vpack.c.b16 %v492, %v490
        %v581 = vpack.c.b16 %v495, %v493
        %v582 = vpack.c.b16 %v496, %v494
        %v583 = vpack.c.b16 %v499, %v497
        %v584 = vpack.c.b16 %v500, %v498
        %v585 = vpack.c.b16 %v503, %v501
        %v586 = vpack.c.b16 %v504, %v502
        %v587 = vpack.c.b16 %v507, %v505
        %v588 = vpack.c.b16 %v508, %v506
        %v589 = vpack.c.b16 %v511, %v509
        %v590 = vpack.c.b16 %v512, %v510
        %v591 = vpack.c.b16 %v515, %v513
        %v592 = vpack.c.b16 %v516, %v514
        %v593 = vpack.c.b16 %v519, %v517
        %v594 = vpack.c.b16 %v520, %v518
        %v595 = vpack.c.b16 %v523, %v521
        %v596 = vpack.c.b16 %v524, %v522
        %v597 = vpack.c.b16 %v527, %v525
        %v598 = vpack.c.b16 %v528, %v526
        %v599 = vpack.c.b16 %v531, %v529
        %v600 = vpack.c.b16 %v532, %v530
        %v601 = vpack.c.b16 %v535, %v533
        %v602 = vpack.c.b16 %v536, %v534
        %v603 = vpack.c.b16 %v539, %v537
        %v604 = vpack.c.b16 %v540, %v538
        %v701 = vunpack.c.l.b16 %v310
        %v702 = vunpack.c.l.b16 %v311
        %v703 = vunpack.c.l.b16 %v312
        %v704 = vunpack.c.l.b16 %v313
        %v705 = vunpack.c.l.b16 %v314
        %v706 = vunpack.c.l.b16 %v315
        %v707 = vunpack.c.l.b16 %v316
        %v708 = vunpack.c.l.b16 %v317
        %v709 = vunpack.c.l.b16 %v318
        %v710 = vunpack.c.l.b16 %v319
        %v711 = vunpack.c.l.b16 %v320
        %v712 = vunpack.c.l.b16 %v321
        %v713 = vunpack.c.l.b16 %v322
        %v714 = vunpack.c.l.b16 %v323
        %v715 = vunpack.c.l.b16 %v324
        %v716 = vunpack.c.l.b16 %v325
        %v717 = vunpack.c.l.b16 %v326
        %v718 = vunpack.c.l.b16 %v327
        %v719 = vunpack.c.l.b16 %v328
        %v720 = vunpack.c.l.b16 %v329
        %v721 = vunpack.c.l.b16 %v330
        %v722 = vunpack.c.l.b16 %v331
        %v723 = vunpack.c.l.b16 %v332
        %v724 = vunpack.c.l.b16 %v333
        %v725 = vunpack.c.l.b16 %v334
        %v726 = vunpack.c.l.b16 %v335
        %v727 = vunpack.c.l.b16 %v336
        %v728 = vunpack.c.l.b16 %v337
        %v729 = vunpack.c.l.b16 %v338
        %v730 = vunpack.c.l.b16 %v339
        %v731 = vunpack.c.l.b16 %v340
        %v732 = vunpack.c.l.b16 %v341
        %v733 = vpack.c.b16 %v702, %v701
        %v734 = vpack.c.b16 %v704, %v703
        %v735 = vpack.c.b16 %v706, %v705
        %v736 = vpack.c.b16 %v708, %v707
        %v737 = vpack.c.b16 %v710, %v709
        %v738 = vpack.c.b16 %v712, %v711
        %v739 = vpack.c.b16 %v714, %v713
        %v740 = vpack.c.b16 %v716, %v715
        %v741 = vpack.c.b16 %v718, %v717
        %v742 = vpack.c.b16 %v720, %v719
        %v743 = vpack.c.b16 %v722, %v721
        %v744 = vpack.c.b16 %v724, %v723
        %v745 = vpack.c.b16 %v726, %v725
        %v746 = vpack.c.b16 %v728, %v727
        %v747 = vpack.c.b16 %v730, %v729
        %v748 = vpack.c.b16 %v732, %v731
        %765 = vmatprep.subr.bf16.mxu0 0
        %766 = vmatpush1.bf16.msra.mxu0 %v733
        %767 = vmatprep.subr.bf16.mxu0 0
        %768 = vmatpush1.bf16.msra.mxu0 %v734
        %769 = vmatprep.subr.bf16.mxu0 0
        %770 = vmatpush1.bf16.msra.mxu0 %v735
        %771 = vmatprep.subr.bf16.mxu0 0
        %772 = vmatpush1.bf16.msra.mxu0 %v736
        %773 = vmatprep.subr.bf16.mxu0 0
        %774 = vmatpush1.bf16.msra.mxu0 %v737
        %775 = vmatprep.subr.bf16.mxu0 0
        %776 = vmatpush1.bf16.msra.mxu0 %v738
        %777 = vmatprep.subr.bf16.mxu0 0
        %778 = vmatpush1.bf16.msra.mxu0 %v739
        %779 = vmatprep.subr.bf16.mxu0 0
        %780 = vmatpush1.bf16.msra.mxu0 %v740
        %781 = vmatprep.subr.bf16.mxu0 0
        %782 = vmatpush1.bf16.msra.mxu0 %v741
        %783 = vmatprep.subr.bf16.mxu0 0
        %784 = vmatpush1.bf16.msra.mxu0 %v742
        %785 = vmatprep.subr.bf16.mxu0 0
        %786 = vmatpush1.bf16.msra.mxu0 %v743
        %787 = vmatprep.subr.bf16.mxu0 0
        %788 = vmatpush1.bf16.msra.mxu0 %v744
        %789 = vmatprep.subr.bf16.mxu0 0
        %790 = vmatpush1.bf16.msra.mxu0 %v745
        %791 = vmatprep.subr.bf16.mxu0 0
        %792 = vmatpush1.bf16.msra.mxu0 %v746
        %793 = vmatprep.subr.bf16.mxu0 0
        %794 = vmatpush1.bf16.msra.mxu0 %v747
        %795 = vmatprep.subr.bf16.mxu0 0
        %796 = vmatpush1.bf16.msra.mxu0 %v748
        %797 = vmatprep.mubr.bf16.mxu0 %v542
        %798 = vmatmul.mubr.bf16.gmra.mrb[0].mxu0 %v541
        %v799 = vpop.f32.mrb[0].mxu0
        %v800 = vadd.f32 %v347, %v799
        %v801 = vpop.f32.mrb[0].mxu0
        %v802 = vpop.f32.mrb[0].mxu0
        %v803 = vadd.f32 %v347, %v802
        %v804 = vpop.f32.mrb[0].mxu0
        %805 = vmatprep.mubr.bf16.mxu0 %v544
        %806 = vmatmul.mubr.bf16.gmra.mrb[0].mxu0 %v543
        %v807 = vpop.f32.mrb[0].mxu0
        %v808 = vadd.f32 %v347, %v807
        %v809 = vpop.f32.mrb[0].mxu0
        %v810 = vpop.f32.mrb[0].mxu0
        %v811 = vadd.f32 %v347, %v810
        %v812 = vpop.f32.mrb[0].mxu0
        %813 = vmatprep.mubr.bf16.mxu0 %v546
        %814 = vmatmul.mubr.bf16.gmra.mrb[0].mxu0 %v545
        %v815 = vpop.f32.mrb[0].mxu0
        %v816 = vadd.f32 %v347, %v815
        %v817 = vpop.f32.mrb[0].mxu0
        %v818 = vpop.f32.mrb[0].mxu0
        %v819 = vadd.f32 %v347, %v818
        %v820 = vpop.f32.mrb[0].mxu0
        %821 = vmatprep.mubr.bf16.mxu0 %v548
        %822 = vmatmul.mubr.bf16.gmra.mrb[0].mxu0 %v547
        %v823 = vpop.f32.mrb[0].mxu0
        %v824 = vadd.f32 %v347, %v823
        %v825 = vpop.f32.mrb[0].mxu0
        %v826 = vpop.f32.mrb[0].mxu0
        %v827 = vadd.f32 %v347, %v826
        %v828 = vpop.f32.mrb[0].mxu0
        %829 = vmatprep.mubr.bf16.mxu0 %v550
        %830 = vmatmul.mubr.bf16.gmra.mrb[0].mxu0 %v549
        %v831 = vpop.f32.mrb[0].mxu0
        %v832 = vadd.f32 %v347, %v831
        %v833 = vpop.f32.mrb[0].mxu0
        %v834 = vpop.f32.mrb[0].mxu0
        %v835 = vadd.f32 %v347, %v834
        %v836 = vpop.f32.mrb[0].mxu0
        %837 = vmatprep.mubr.bf16.mxu0 %v552
        %838 = vmatmul.mubr.bf16.gmra.mrb[0].mxu0 %v551
        %v839 = vpop.f32.mrb[0].mxu0
        %v840 = vadd.f32 %v347, %v839
        %v841 = vpop.f32.mrb[0].mxu0
        %v842 = vpop.f32.mrb[0].mxu0
        %v843 = vadd.f32 %v347, %v842
        %v844 = vpop.f32.mrb[0].mxu0
        %845 = vmatprep.mubr.bf16.mxu0 %v554
        %846 = vmatmul.mubr.bf16.gmra.mrb[0].mxu0 %v553
        %v847 = vpop.f32.mrb[0].mxu0
        %v848 = vadd.f32 %v347, %v847
        %v849 = vpop.f32.mrb[0].mxu0
        %v850 = vpop.f32.mrb[0].mxu0
        %v851 = vadd.f32 %v347, %v850
        %v852 = vpop.f32.mrb[0].mxu0
        %853 = vmatprep.mubr.bf16.mxu0 %v556
        %854 = vmatmul.mubr.bf16.gmra.mrb[0].mxu0 %v555
        %v855 = vpop.f32.mrb[0].mxu0
        %v856 = vadd.f32 %v347, %v855
        %v857 = vpop.f32.mrb[0].mxu0
        %v858 = vpop.f32.mrb[0].mxu0
        %v859 = vadd.f32 %v347, %v858
        %v860 = vpop.f32.mrb[0].mxu0
        %861 = vmatprep.mubr.bf16.mxu0 %v558
        %862 = vmatmul.mubr.bf16.gmra.mrb[0].mxu0 %v557
        %v863 = vpop.f32.mrb[0].mxu0
        %v864 = vadd.f32 %v347, %v863
        %v865 = vpop.f32.mrb[0].mxu0
        %v866 = vpop.f32.mrb[0].mxu0
        %v867 = vadd.f32 %v347, %v866
        %v868 = vpop.f32.mrb[0].mxu0
        %869 = vmatprep.mubr.bf16.mxu0 %v560
        %870 = vmatmul.mubr.bf16.gmra.mrb[0].mxu0 %v559
        %v871 = vpop.f32.mrb[0].mxu0
        %v872 = vadd.f32 %v347, %v871
        %v873 = vpop.f32.mrb[0].mxu0
        %v874 = vpop.f32.mrb[0].mxu0
        %v875 = vadd.f32 %v347, %v874
        %v876 = vpop.f32.mrb[0].mxu0
        %877 = vmatprep.mubr.bf16.mxu0 %v562
        %878 = vmatmul.mubr.bf16.gmra.mrb[0].mxu0 %v561
        %v879 = vpop.f32.mrb[0].mxu0
        %v880 = vadd.f32 %v347, %v879
        %v881 = vpop.f32.mrb[0].mxu0
        %v882 = vpop.f32.mrb[0].mxu0
        %v883 = vadd.f32 %v347, %v882
        %v884 = vpop.f32.mrb[0].mxu0
        %885 = vmatprep.mubr.bf16.mxu0 %v564
        %886 = vmatmul.mubr.bf16.gmra.mrb[0].mxu0 %v563
        %v887 = vpop.f32.mrb[0].mxu0
        %v888 = vadd.f32 %v347, %v887
        %v889 = vpop.f32.mrb[0].mxu0
        %v890 = vpop.f32.mrb[0].mxu0
        %v891 = vadd.f32 %v347, %v890
        %v892 = vpop.f32.mrb[0].mxu0
        %893 = vmatprep.mubr.bf16.mxu0 %v566
        %894 = vmatmul.mubr.bf16.gmra.mrb[0].mxu0 %v565
        %v895 = vpop.f32.mrb[0].mxu0
        %v896 = vadd.f32 %v347, %v895
        %v897 = vpop.f32.mrb[0].mxu0
        %v898 = vpop.f32.mrb[0].mxu0
        %v899 = vadd.f32 %v347, %v898
        %v900 = vpop.f32.mrb[0].mxu0
        %901 = vmatprep.mubr.bf16.mxu0 %v568
        %902 = vmatmul.mubr.bf16.gmra.mrb[0].mxu0 %v567
        %v903 = vpop.f32.mrb[0].mxu0
        %v904 = vadd.f32 %v347, %v903
        %v905 = vpop.f32.mrb[0].mxu0
        %v906 = vpop.f32.mrb[0].mxu0
        %v907 = vadd.f32 %v347, %v906
        %v908 = vpop.f32.mrb[0].mxu0
        %909 = vmatprep.mubr.bf16.mxu0 %v570
        %910 = vmatmul.mubr.bf16.gmra.mrb[0].mxu0 %v569
        %v911 = vpop.f32.mrb[0].mxu0
        %v912 = vadd.f32 %v347, %v911
        %v913 = vpop.f32.mrb[0].mxu0
        %v914 = vpop.f32.mrb[0].mxu0
        %v915 = vadd.f32 %v347, %v914
        %v916 = vpop.f32.mrb[0].mxu0
        %917 = vmatprep.mubr.bf16.mxu0 %v572
        %918 = vmatmul.mubr.bf16.gmra.mrb[0].mxu0 %v571
        %v919 = vpop.f32.mrb[0].mxu0
        %v920 = vadd.f32 %v347, %v919
        %v921 = vpop.f32.mrb[0].mxu0
        %v922 = vpop.f32.mrb[0].mxu0
        %v923 = vadd.f32 %v347, %v922
        %v924 = vpop.f32.mrb[0].mxu0
        %925 = vmatprep.mubr.bf16.mxu0 %v574
        %926 = vmatmul.mubr.bf16.gmra.mrb[0].mxu0 %v573
        %v927 = vpop.f32.mrb[0].mxu0
        %v928 = vadd.f32 %v347, %v927
        %v929 = vpop.f32.mrb[0].mxu0
        %v930 = vpop.f32.mrb[0].mxu0
        %v931 = vadd.f32 %v347, %v930
        %v932 = vpop.f32.mrb[0].mxu0
        %933 = vmatprep.mubr.bf16.mxu0 %v576
        %934 = vmatmul.mubr.bf16.gmra.mrb[0].mxu0 %v575
        %v935 = vpop.f32.mrb[0].mxu0
        %v936 = vadd.f32 %v347, %v935
        %v937 = vpop.f32.mrb[0].mxu0
        %v938 = vpop.f32.mrb[0].mxu0
        %v939 = vadd.f32 %v347, %v938
        %v940 = vpop.f32.mrb[0].mxu0
        %941 = vmatprep.mubr.bf16.mxu0 %v578
        %942 = vmatmul.mubr.bf16.gmra.mrb[0].mxu0 %v577
        %v943 = vpop.f32.mrb[0].mxu0
        %v944 = vadd.f32 %v347, %v943
        %v945 = vpop.f32.mrb[0].mxu0
        %v946 = vpop.f32.mrb[0].mxu0
        %v947 = vadd.f32 %v347, %v946
        %v948 = vpop.f32.mrb[0].mxu0
        %949 = vmatprep.mubr.bf16.mxu0 %v580
        %950 = vmatmul.mubr.bf16.gmra.mrb[0].mxu0 %v579
        %v951 = vpop.f32.mrb[0].mxu0
        %v952 = vadd.f32 %v347, %v951
        %v953 = vpop.f32.mrb[0].mxu0
        %v954 = vpop.f32.mrb[0].mxu0
        %v955 = vadd.f32 %v347, %v954
        %v956 = vpop.f32.mrb[0].mxu0
        %957 = vmatprep.mubr.bf16.mxu0 %v582
        %958 = vmatmul.mubr.bf16.gmra.mrb[0].mxu0 %v581
        %v959 = vpop.f32.mrb[0].mxu0
        %v960 = vadd.f32 %v347, %v959
        %v961 = vpop.f32.mrb[0].mxu0
        %v962 = vpop.f32.mrb[0].mxu0
        %v963 = vadd.f32 %v347, %v962
        %v964 = vpop.f32.mrb[0].mxu0
        %965 = vmatprep.mubr.bf16.mxu0 %v584
        %966 = vmatmul.mubr.bf16.gmra.mrb[0].mxu0 %v583
        %v967 = vpop.f32.mrb[0].mxu0
        %v968 = vadd.f32 %v347, %v967
        %v969 = vpop.f32.mrb[0].mxu0
        %v970 = vpop.f32.mrb[0].mxu0
        %v971 = vadd.f32 %v347, %v970
        %v972 = vpop.f32.mrb[0].mxu0
        %973 = vmatprep.mubr.bf16.mxu0 %v586
        %974 = vmatmul.mubr.bf16.gmra.mrb[0].mxu0 %v585
        %v975 = vpop.f32.mrb[0].mxu0
        %v976 = vadd.f32 %v347, %v975
        %v977 = vpop.f32.mrb[0].mxu0
        %v978 = vpop.f32.mrb[0].mxu0
        %v979 = vadd.f32 %v347, %v978
        %v980 = vpop.f32.mrb[0].mxu0
        %981 = vmatprep.mubr.bf16.mxu0 %v588
        %982 = vmatmul.mubr.bf16.gmra.mrb[0].mxu0 %v587
        %v983 = vpop.f32.mrb[0].mxu0
        %v984 = vadd.f32 %v347, %v983
        %v985 = vpop.f32.mrb[0].mxu0
        %v986 = vpop.f32.mrb[0].mxu0
        %v987 = vadd.f32 %v347, %v986
        %v988 = vpop.f32.mrb[0].mxu0
        %989 = vmatprep.mubr.bf16.mxu0 %v590
        %990 = vmatmul.mubr.bf16.gmra.mrb[0].mxu0 %v589
        %v991 = vpop.f32.mrb[0].mxu0
        %v992 = vadd.f32 %v347, %v991
        %v993 = vpop.f32.mrb[0].mxu0
        %v994 = vpop.f32.mrb[0].mxu0
        %v995 = vadd.f32 %v347, %v994
        %v996 = vpop.f32.mrb[0].mxu0
        %997 = vmatprep.mubr.bf16.mxu0 %v592
        %998 = vmatmul.mubr.bf16.gmra.mrb[0].mxu0 %v591
        %v999 = vpop.f32.mrb[0].mxu0
        %v1000 = vadd.f32 %v347, %v999
        %v1001 = vpop.f32.mrb[0].mxu0
        %v1002 = vpop.f32.mrb[0].mxu0
        %v1003 = vadd.f32 %v347, %v1002
        %v1004 = vpop.f32.mrb[0].mxu0
        %1005 = vmatprep.mubr.bf16.mxu0 %v594
        %1006 = vmatmul.mubr.bf16.gmra.mrb[0].mxu0 %v593
        %v1007 = vpop.f32.mrb[0].mxu0
        %v1008 = vadd.f32 %v347, %v1007
        %v1009 = vpop.f32.mrb[0].mxu0
        %v1010 = vpop.f32.mrb[0].mxu0
        %v1011 = vadd.f32 %v347, %v1010
        %v1012 = vpop.f32.mrb[0].mxu0
        %1013 = vmatprep.mubr.bf16.mxu0 %v596
        %1014 = vmatmul.mubr.bf16.gmra.mrb[0].mxu0 %v595
        %v1015 = vpop.f32.mrb[0].mxu0
        %v1016 = vadd.f32 %v347, %v1015
        %v1017 = vpop.f32.mrb[0].mxu0
        %v1018 = vpop.f32.mrb[0].mxu0
        %v1019 = vadd.f32 %v347, %v1018
        %v1020 = vpop.f32.mrb[0].mxu0
        %1021 = vmatprep.mubr.bf16.mxu0 %v598
        %1022 = vmatmul.mubr.bf16.gmra.mrb[0].mxu0 %v597
        %v1023 = vpop.f32.mrb[0].mxu0
        %v1024 = vadd.f32 %v347, %v1023
        %v1025 = vpop.f32.mrb[0].mxu0
        %v1026 = vpop.f32.mrb[0].mxu0
        %v1027 = vadd.f32 %v347, %v1026
        %v1028 = vpop.f32.mrb[0].mxu0
        %1029 = vmatprep.mubr.bf16.mxu0 %v600
        %1030 = vmatmul.mubr.bf16.gmra.mrb[0].mxu0 %v599
        %v1031 = vpop.f32.mrb[0].mxu0
        %v1032 = vadd.f32 %v347, %v1031
        %v1033 = vpop.f32.mrb[0].mxu0
        %v1034 = vpop.f32.mrb[0].mxu0
        %v1035 = vadd.f32 %v347, %v1034
        %v1036 = vpop.f32.mrb[0].mxu0
        %1037 = vmatprep.mubr.bf16.mxu0 %v602
        %1038 = vmatmul.mubr.bf16.gmra.mrb[0].mxu0 %v601
        %v1039 = vpop.f32.mrb[0].mxu0
        %v1040 = vadd.f32 %v347, %v1039
        %v1041 = vpop.f32.mrb[0].mxu0
        %v1042 = vpop.f32.mrb[0].mxu0
        %v1043 = vadd.f32 %v347, %v1042
        %v1044 = vpop.f32.mrb[0].mxu0
        %1045 = vmatprep.mubr.bf16.mxu0 %v604
        %1046 = vmatmul.mubr.bf16.gmra.mrb[0].mxu0 %v603
        %v1047 = vpop.f32.mrb[0].mxu0
        %v1048 = vadd.f32 %v347, %v1047
        %v1049 = vpop.f32.mrb[0].mxu0
        %v1050 = vpop.f32.mrb[0].mxu0
        %v1051 = vadd.f32 %v347, %v1050
        %v1052 = vpop.f32.mrb[0].mxu0
        %1053 = vdwg.mxu0
        %1054 = vst [vmem:[%s243] sm:$0xff] %v800
        %1055 = vst [vmem:[%s243 + $0x8] sm:$0xff] %v803
        %1056 = vst [vmem:[%s243 + $0x10] sm:$0xff] %v808
        %1057 = vst [vmem:[%s243 + $0x18] sm:$0xff] %v811
        %1058 = vst [vmem:[%s243 + $0x20] sm:$0xff] %v816
        %1059 = vst [vmem:[%s243 + $0x28] sm:$0xff] %v819
        %1060 = vst [vmem:[%s243 + $0x30] sm:$0xff] %v824
        %1061 = vst [vmem:[%s243 + $0x38] sm:$0xff] %v827
        %1062 = vst [vmem:[%s243 + $0x40] sm:$0xff] %v832
        %1063 = vst [vmem:[%s243 + $0x48] sm:$0xff] %v835
        %1064 = vst [vmem:[%s243 + $0x50] sm:$0xff] %v840
        %1065 = vst [vmem:[%s243 + $0x58] sm:$0xff] %v843
        %1066 = vst [vmem:[%s243 + $0x60] sm:$0xff] %v848
        %1067 = vst [vmem:[%s243 + $0x68] sm:$0xff] %v851
        %1068 = vst [vmem:[%s243 + $0x70] sm:$0xff] %v856
        %1069 = vst [vmem:[%s243 + $0x78] sm:$0xff] %v859
        %1070 = vst [vmem:[%s243 + $0x80] sm:$0xff] %v864
        %1071 = vst [vmem:[%s243 + $0x88] sm:$0xff] %v867
        %1072 = vst [vmem:[%s243 + $0x90] sm:$0xff] %v872
        %1073 = vst [vmem:[%s243 + $0x98] sm:$0xff] %v875
        %1074 = vst [vmem:[%s243 + $0xa0] sm:$0xff] %v880
        %1075 = vst [vmem:[%s243 + $0xa8] sm:$0xff] %v883
        %1076 = vst [vmem:[%s243 + $0xb0] sm:$0xff] %v888
        %1077 = vst [vmem:[%s243 + $0xb8] sm:$0xff] %v891
        %1078 = vst [vmem:[%s243 + $0xc0] sm:$0xff] %v896
        %1079 = vst [vmem:[%s243 + $0xc8] sm:$0xff] %v899
        %1080 = vst [vmem:[%s243 + $0xd0] sm:$0xff] %v904
        %1081 = vst [vmem:[%s243 + $0xd8] sm:$0xff] %v907
        %1082 = vst [vmem:[%s243 + $0xe0] sm:$0xff] %v912
        %1083 = vst [vmem:[%s243 + $0xe8] sm:$0xff] %v915
        %1084 = vst [vmem:[%s243 + $0xf0] sm:$0xff] %v920
        %1085 = vst [vmem:[%s243 + $0xf8] sm:$0xff] %v923
        %1086 = vst [vmem:[%s243 + $0x100] sm:$0xff] %v928
        %1087 = vst [vmem:[%s243 + $0x108] sm:$0xff] %v931
        %1088 = vst [vmem:[%s243 + $0x110] sm:$0xff] %v936
        %1089 = vst [vmem:[%s243 + $0x118] sm:$0xff] %v939
        %1090 = vst [vmem:[%s243 + $0x120] sm:$0xff] %v944
        %1091 = vst [vmem:[%s243 + $0x128] sm:$0xff] %v947
        %1092 = vst [vmem:[%s243 + $0x130] sm:$0xff] %v952
        %1093 = vst [vmem:[%s243 + $0x138] sm:$0xff] %v955
        %1094 = vst [vmem:[%s243 + $0x140] sm:$0xff] %v960
        %1095 = vst [vmem:[%s243 + $0x148] sm:$0xff] %v963
        %1096 = vst [vmem:[%s243 + $0x150] sm:$0xff] %v968
        %1097 = vst [vmem:[%s243 + $0x158] sm:$0xff] %v971
        %1098 = vst [vmem:[%s243 + $0x160] sm:$0xff] %v976
        %1099 = vst [vmem:[%s243 + $0x168] sm:$0xff] %v979
        %1100 = vst [vmem:[%s243 + $0x170] sm:$0xff] %v984
        %1101 = vst [vmem:[%s243 + $0x178] sm:$0xff] %v987
        %1102 = vst [vmem:[%s243 + $0x180] sm:$0xff] %v992
        %1103 = vst [vmem:[%s243 + $0x188] sm:$0xff] %v995
        %1104 = vst [vmem:[%s243 + $0x190] sm:$0xff] %v1000
        %1105 = vst [vmem:[%s243 + $0x198] sm:$0xff] %v1003
        %1106 = vst [vmem:[%s243 + $0x1a0] sm:$0xff] %v1008
        %1107 = vst [vmem:[%s243 + $0x1a8] sm:$0xff] %v1011
        %1108 = vst [vmem:[%s243 + $0x1b0] sm:$0xff] %v1016
        %1109 = vst [vmem:[%s243 + $0x1b8] sm:$0xff] %v1019
        %1110 = vst [vmem:[%s243 + $0x1c0] sm:$0xff] %v1024
        %1111 = vst [vmem:[%s243 + $0x1c8] sm:$0xff] %v1027
        %1112 = vst [vmem:[%s243 + $0x1d0] sm:$0xff] %v1032
        %1113 = vst [vmem:[%s243 + $0x1d8] sm:$0xff] %v1035
        %1114 = vst [vmem:[%s243 + $0x1e0] sm:$0xff] %v1040
        %1115 = vst [vmem:[%s243 + $0x1e8] sm:$0xff] %v1043
        %1116 = vst [vmem:[%s243 + $0x1f0] sm:$0xff] %v1048
        %1117 = vst [vmem:[%s243 + $0x1f8] sm:$0xff] %v1051
        %s1118 = smul.u32 64, %s21
        %p1119 = scmp.lt.s32.totalorder %s1118, 1023
        %s1120 = scalar_select %p1119, %s1118, 1023
        %p1121 = scmp.lt.s32.totalorder %s22, 0
        %s1122 = scalar_select %p1121, %s22, 0
        %s1123 = sadd.s32 %s1122, %s1120
        %s1124 = smul.addr %s1123, 8
        %s1125 = scalar_lea.vmem %s3, %s1124
        // Predicated region
        $region37: #{matmul_bias_act.1} parent=31 // pred_check
          %p1126 = pneg %p127
        $region38: #{matmul_bias_act.1} parent=31 // pred_check_branch
          %1128 = sbr.rel (%p1126) target = $region40
        $region39: #{matmul_bias_act.1} parent=31 // pred_region
          %s1129 = smul.u32 64, %s21
        $region40: #{matmul_bias_act.1} parent=31 // pred_fallthru
          _
      $region32: #{matmul_bias_act.1} parent=5 // pred_fallthru
        _
      %p1130 = scmp.le.s32.totalorder 2, %s12
      // Predicated region
      $region41: #{matmul_bias_act.1} parent=5 // pred_check
        %p1131 = pneg %p1130
      $region42: #{matmul_bias_act.1} parent=5 // pred_check_branch
        %1133 = sbr.rel (%p1131) target = $region44
      $region43: #{matmul_bias_act.1} parent=5 // pred_region
        %s1134 = ssub.s32 %s12, 2
        // Predicated region
        $region45: #{matmul_bias_act.1} parent=43 // pred_check
          %p1135 = pneg %p133
        $region46: #{matmul_bias_act.1} parent=43 // pred_check_branch
          %1137 = sbr.rel (%p1135) target = $region48
        $region47: #{matmul_bias_act.1} parent=43 // pred_region
          %s1138 = smul.u32 64, %s23
          %p1139 = scmp.lt.s32.totalorder %s1138, 1023
          %s1140 = scalar_select %p1139, %s1138, 1023
          %p1141 = scmp.lt.s32.totalorder %s24, 0
          %s1142 = scalar_select %p1141, %s24, 0
          %s1143 = sadd.s32 %s1142, %s1140
          %s1144 = smul.addr %s1143, 8
          %s1145 = scalar_lea.vmem %s3, %s1144
        $region48: #{matmul_bias_act.1} parent=43 // pred_fallthru
          _
      $region44: #{matmul_bias_act.1} parent=5 // pred_fallthru
        _
    $region6: #{matmul_bias_act.1} parent=1 // loop_footer
      %s16 = sadd.s32 1, %s12
    $region7: #{matmul_bias_act.1} parent=1 // loop_footer_branch
      %11 = sbr.rel target = $region3
    $region8: #{matmul_bias_act.1} parent=1 // loop_exit
      _
    %1146 = vsyncpa [#allocation3], 1
    %s1147 = scalar_lea.sflag [#allocation3], 1
    %1148 = vsyncpa %s1147, 1

</llo_original>
